<compile_context>
chip_gen: v5e
topology: v5e:2x2
jax: 0.10.0
libtpu: 0.0.40
codegen_flags: <defaults>
</compile_context>

<pallas_src>
import functools

import jax
import jax.numpy as jnp
from jax.experimental import pallas as pl
from jax.experimental.pallas import tpu as pltpu

VALID_THETA = {
    't-shirt': [0, 1, 2, 3, 6, 9, 12, 13, 14, 16, 17, 18, 19],
    'old-t-shirt': [0, 1, 2, 3, 6, 9, 12, 13, 14, 16, 17, 18, 19],
    'shirt': [0, 1, 2, 3, 6, 9, 12, 13, 14, 16, 17, 18, 19, 20, 21],
    'pant': [0, 1, 2, 4, 5, 7, 8],
    'skirt': [0, 1, 2],
}


# ---------------------------------------------------------------------------
# Masking glue (plain JAX, matches mask_betas / mask_gammas semantics)
# ---------------------------------------------------------------------------
def mask_betas(betas, cloth_type):
    valid_beta = jnp.array([0, 1], dtype=jnp.int32)
    col = jnp.arange(betas.shape[1])
    mask = jnp.isin(col, valid_beta).astype(betas.dtype)
    return betas * mask[None, :]


def mask_gammas(gammas, cloth_type):
    valid_gamma = jnp.array([0, 1], dtype=jnp.int32)
    col = jnp.arange(gammas.shape[1])
    mask = jnp.isin(col, valid_gamma).astype(gammas.dtype)
    gammas = gammas * mask[None, :]
    if cloth_type == 'old-t-shirt':
        gammas = gammas + jnp.array([[0.0, 0.0, 1.5, 0.0]], dtype=jnp.float32)
    return gammas


# ---------------------------------------------------------------------------
# Pallas kernels
# ---------------------------------------------------------------------------
def _hidden_kernel(x_ref, w0_ref, b0_ref, w1_ref, b1_ref, h1_ref):
    """h1 = relu(relu(x @ W0 + b0) @ W1 + b1), single VMEM block."""
    x = x_ref[...].astype(jnp.bfloat16)                       # [N, 14]
    h0 = jnp.dot(x, w0_ref[...],
                 preferred_element_type=jnp.float32) + b0_ref[...]
    h0 = jnp.maximum(h0, 0.0)                                 # ReLU
    # Dropout(p=0.2): identity in eval mode.
    h1 = jnp.dot(h0.astype(jnp.bfloat16), w1_ref[...],
                 preferred_element_type=jnp.float32) + b1_ref[...]
    h1 = jnp.maximum(h1, 0.0)                                 # ReLU
    h1_ref[...] = h1.astype(h1_ref.dtype)                     # bf16 out


def _out_kernel(h1_ref, w2_ref, b2_ref, o_ref):
    """One (N, TN) output tile: h1 @ W2_tile + b2_tile (f32 accumulate)."""
    out = jnp.dot(h1_ref[...], w2_ref[...],
                  preferred_element_type=jnp.float32) + b2_ref[...]
    o_ref[...] = out.astype(o_ref.dtype)


def _full_spec(shape):
    # Whole (small) array resident in VMEM as a single block.
    return pl.BlockSpec(shape, lambda: (0,) * len(shape))


def _round_up(x, m):
    return ((x + m - 1) // m) * m


# ---------------------------------------------------------------------------
# Forward wrapper
# ---------------------------------------------------------------------------
@functools.partial(jax.jit, static_argnames=('cloth_type', 'tile_n'))
def tailornet_ss2g_forward(betas, gammas, params, cloth_type='t-shirt',
                           tile_n=1024):
    """params: dict with w0,b0,w1,b1,w2,b2.  Weights stored as [in, out]."""
    betas = mask_betas(betas, cloth_type)
    gammas = mask_gammas(gammas, cloth_type)
    x = jnp.concatenate((betas, gammas), axis=1).astype(jnp.float32)  # [N,14]

    bf16 = jnp.bfloat16
    w0 = params['w0'].astype(bf16)
    w1 = params['w1'].astype(bf16)
    w2 = params['w2'].astype(bf16)
    b0 = params['b0'].astype(jnp.float32)
    b1 = params['b1'].astype(jnp.float32)
    b2 = params['b2'].astype(jnp.float32)

    n = x.shape[0]
    h = w0.shape[1]
    n_verts = w2.shape[1]

    # ---- Stage 1: tiny hidden MLP (14 -> H -> H), single block ------------
    h1 = pl.pallas_call(
        _hidden_kernel,
        out_shape=jax.ShapeDtypeStruct((n, h), bf16),
        in_specs=[_full_spec(x.shape),
                  _full_spec(w0.shape), _full_spec(b0.shape),
                  _full_spec(w1.shape), _full_spec(b1.shape)],
        out_specs=_full_spec((n, h)),
    )(x, w0, b0, w1, b1)

    # ---- Stage 2: tiled output layer h1 @ W2 + b2 --------------------------
    # Lane-dense tile width (multiple of 128), n_verts padded to a multiple.
    tn = min(tile_n, _round_up(n_verts, 128))
    tn = _round_up(tn, 128)
    nv_pad = _round_up(n_verts, tn)
    if nv_pad != n_verts:
        w2 = jnp.pad(w2, ((0, 0), (0, nv_pad - n_verts)))
        b2 = jnp.pad(b2, ((0, 0), (0, nv_pad - n_verts)))
    grid = (nv_pad // tn,)

    # VMEM footprint: resident h1 (bf16) + double-buffered w2/b2/out tiles,
    # plus margin.  Clamp to 48 MiB so we never exceed v7x's physical 64 MiB.
    vmem_need = (n * h * 2) + 2 * (h * tn * 2) + 2 * (tn * 4) + 2 * (n * tn * 4)
    vmem_limit = int(min(max(vmem_need + (4 << 20), 8 << 20), 48 << 20))

    cost = pl.CostEstimate(
        flops=2 * n * h * nv_pad,
        transcendentals=0,
        bytes_accessed=n * h * 2 + h * nv_pad * 2 + nv_pad * 4 + n * nv_pad * 4,
    )

    out = pl.pallas_call(
        _out_kernel,
        out_shape=jax.ShapeDtypeStruct((n, nv_pad), jnp.float32),
        grid=grid,
        in_specs=[
            pl.BlockSpec((n, h), lambda j: (0, 0)),    # h1: resident in VMEM
            pl.BlockSpec((h, tn), lambda j: (0, j)),   # W2: streamed bf16 tile
            pl.BlockSpec((1, tn), lambda j: (0, j)),   # b2 tile
        ],
        out_specs=pl.BlockSpec((n, tn), lambda j: (0, j)),
        compiler_params=pltpu.CompilerParams(
            dimension_semantics=("parallel",),
            vmem_limit_bytes=vmem_limit,
        ),
        cost_estimate=cost,
    )(h1, w2, b2)

    return out[:, :n_verts]


# ---------------------------------------------------------------------------
# Deterministic parameter init (mimics torch.nn.Linear default init)
# ---------------------------------------------------------------------------
def init_params(key, input_size, hidden_size, output_size):
    def linear(key, fan_in, fan_out):
        kw, kb = jax.random.split(key)
        bound = 1.0 / jnp.sqrt(fan_in)
        w = jax.random.uniform(kw, (fan_in, fan_out), jnp.float32,
                               minval=-bound, maxval=bound)
        b = jax.random.uniform(kb, (1, fan_out), jnp.float32,
                               minval=-bound, maxval=bound)
        return w, b

    k0, k1, k2 = jax.random.split(key, 3)
    w0, b0 = linear(k0, input_size, hidden_size)
    w1, b1 = linear(k1, hidden_size, hidden_size)
    w2, b2 = linear(k2, hidden_size, output_size)
    return dict(w0=w0, b0=b0, w1=w1, b1=b1, w2=w2, b2=b2)


# ---------------------------------------------------------------------------
# Pure-JAX reference (mirrors the kernel's bf16-weight / f32-accumulate math)
# ---------------------------------------------------------------------------
def reference_forward(betas, gammas, params, cloth_type='t-shirt'):
    betas = mask_betas(betas, cloth_type)
    gammas = mask_gammas(gammas, cloth_type)
    x = jnp.concatenate((betas, gammas), axis=1).astype(jnp.float32)
    bf16 = jnp.bfloat16
    w0 = params['w0'].astype(bf16)
    w1 = params['w1'].astype(bf16)
    w2 = params['w2'].astype(bf16)
    h0 = jnp.maximum(jnp.dot(x.astype(bf16), w0,
                             preferred_element_type=jnp.float32)
                     + params['b0'], 0.0)
    h1 = jnp.maximum(jnp.dot(h0.astype(bf16), w1,
                             preferred_element_type=jnp.float32)
                     + params['b1'], 0.0)
    return jnp.dot(h1.astype(bf16), w2,
                   preferred_element_type=jnp.float32) + params['b2']


if __name__ == "__main__":
    key = jax.random.PRNGKey(0)
    k_beta, k_gamma, k_param = jax.random.split(key, 3)

    # Small, forward-consistent shapes:
    #   batch=8, betas [8, 10], gammas [8, 4], hidden_size=128, n_verts=256
    # tile_n=128 -> 2 output tiles so the n_verts grid / pipelining is
    # actually exercised even at toy size.
    batch = 8
    hidden_size = 128
    n_verts = 256
    cloth_type = 't-shirt'

    betas = jax.random.normal(k_beta, (batch, 10), jnp.float32)
    gammas = jax.random.normal(k_gamma, (batch, 4), jnp.float32)
    params = init_params(k_param, input_size=10 + 4,
                         hidden_size=hidden_size, output_size=n_verts)

    pred_verts = tailornet_ss2g_forward(betas, gammas, params,
                                        cloth_type=cloth_type, tile_n=128)
    pred_verts = jax.block_until_ready(pred_verts)

    ref = reference_forward(betas, gammas, params, cloth_type=cloth_type)
    assert pred_verts.shape == (batch, n_verts)
    assert jnp.allclose(pred_verts, ref, atol=5e-3, rtol=5e-3), \
        "Pallas kernel output mismatch vs reference"

    print("KERNEL_OK")
</pallas_src>

<mosaic_0001>
module attributes {stable_mosaic.version = 11 : i64} {
  func.func @_hidden_kernel(%arg0: memref<8x14xf32, #tpu.memory_space<vmem>>, %arg1: memref<14x128xbf16, #tpu.memory_space<vmem>>, %arg2: memref<1x128xf32, #tpu.memory_space<vmem>>, %arg3: memref<128x128xbf16, #tpu.memory_space<vmem>>, %arg4: memref<1x128xf32, #tpu.memory_space<vmem>>, %arg5: memref<8x128xbf16, #tpu.memory_space<vmem>>) attributes {dimension_semantics = [], scalar_prefetch = 0 : i64, scratch_operands = 0 : i64, tpu.core_type = #tpu.core_type<tc>} {
    %c0 = arith.constant 0 : index
    %c0_0 = arith.constant 0 : index
    %0 = vector.load %arg0[%c0, %c0_0] : memref<8x14xf32, #tpu.memory_space<vmem>>, vector<8x14xf32>
    %1 = arith.truncf %0 : vector<8x14xf32> to vector<8x14xbf16>
    %c0_1 = arith.constant 0 : index
    %c0_2 = arith.constant 0 : index
    %2 = vector.load %arg1[%c0_1, %c0_2] : memref<14x128xbf16, #tpu.memory_space<vmem>>, vector<14x128xbf16>
    %cst = arith.constant dense<0.000000e+00> : vector<8x128xf32>
    %3 = tpu.matmul %1, %2, %cst {dimension_numbers = #tpu.dot_dimension_numbers<[1], [0], [0], [1], [0, 0, 1, 1], [], []>} : vector<8x14xbf16>, vector<14x128xbf16>, vector<8x128xf32> -> vector<8x128xf32>
    %c0_3 = arith.constant 0 : index
    %c0_4 = arith.constant 0 : index
    %4 = vector.load %arg2[%c0_3, %c0_4] : memref<1x128xf32, #tpu.memory_space<vmem>>, vector<1x128xf32>
    %5 = vector.broadcast %4 : vector<1x128xf32> to vector<8x128xf32>
    %6 = arith.addf %3, %5 : vector<8x128xf32>
    %cst_5 = arith.constant 0.000000e+00 : f32
    %7 = vector.broadcast %cst_5 : f32 to vector<8x128xf32>
    %8 = arith.maximumf %6, %7 : vector<8x128xf32>
    %9 = arith.truncf %8 : vector<8x128xf32> to vector<8x128xbf16>
    %c0_6 = arith.constant 0 : index
    %c0_7 = arith.constant 0 : index
    %10 = vector.load %arg3[%c0_6, %c0_7] : memref<128x128xbf16, #tpu.memory_space<vmem>>, vector<128x128xbf16>
    %cst_8 = arith.constant dense<0.000000e+00> : vector<8x128xf32>
    %11 = tpu.matmul %9, %10, %cst_8 {dimension_numbers = #tpu.dot_dimension_numbers<[1], [0], [0], [1], [0, 0, 1, 1], [], []>} : vector<8x128xbf16>, vector<128x128xbf16>, vector<8x128xf32> -> vector<8x128xf32>
    %c0_9 = arith.constant 0 : index
    %c0_10 = arith.constant 0 : index
    %12 = vector.load %arg4[%c0_9, %c0_10] : memref<1x128xf32, #tpu.memory_space<vmem>>, vector<1x128xf32>
    %13 = vector.broadcast %12 : vector<1x128xf32> to vector<8x128xf32>
    %14 = arith.addf %11, %13 : vector<8x128xf32>
    %cst_11 = arith.constant 0.000000e+00 : f32
    %15 = vector.broadcast %cst_11 : f32 to vector<8x128xf32>
    %16 = arith.maximumf %14, %15 : vector<8x128xf32>
    %17 = arith.truncf %16 : vector<8x128xf32> to vector<8x128xbf16>
    %c0_12 = arith.constant 0 : index
    %c0_13 = arith.constant 0 : index
    %18 = vector.load %arg5[%c0_12, %c0_13] : memref<8x128xbf16, #tpu.memory_space<vmem>>, vector<8x128xbf16>
    tpu.vector_store %arg5[%c0_12, %c0_13], %17 {strides = array<i32>} : memref<8x128xbf16, #tpu.memory_space<vmem>>, vector<8x128xbf16>,
    return
  }
}

module attributes {stable_mosaic.version = 11 : i64} {
  func.func @_out_kernel(%arg0: i32, %arg1: memref<8x128xbf16, #tpu.memory_space<vmem>>, %arg2: memref<128x128xbf16, #tpu.memory_space<vmem>>, %arg3: memref<1x128xf32, #tpu.memory_space<vmem>>, %arg4: memref<8x128xf32, #tpu.memory_space<vmem>>) attributes {dimension_semantics = [#tpu.dimension_semantics<parallel>], iteration_bounds = array<i64: 2>, scalar_prefetch = 0 : i64, scratch_operands = 0 : i64, tpu.core_type = #tpu.core_type<tc>, window_params = [{pipeline_mode = #tpu.pipeline_mode<synchronous>, transform_indices = @transform_0, window_bounds = array<i64: 8, 128>}, {transform_indices = @transform_1, window_bounds = array<i64: 128, 128>}, {transform_indices = @transform_2, window_bounds = array<i64: 1, 128>}, {transform_indices = @transform_3, window_bounds = array<i64: 8, 128>}]} {
    %c0 = arith.constant 0 : index
    %c0_0 = arith.constant 0 : index
    %0 = vector.load %arg1[%c0, %c0_0] : memref<8x128xbf16, #tpu.memory_space<vmem>>, vector<8x128xbf16>
    %c0_1 = arith.constant 0 : index
    %c0_2 = arith.constant 0 : index
    %1 = vector.load %arg2[%c0_1, %c0_2] : memref<128x128xbf16, #tpu.memory_space<vmem>>, vector<128x128xbf16>
    %cst = arith.constant dense<0.000000e+00> : vector<8x128xf32>
    %2 = tpu.matmul %0, %1, %cst {dimension_numbers = #tpu.dot_dimension_numbers<[1], [0], [0], [1], [0, 0, 1, 1], [], []>} : vector<8x128xbf16>, vector<128x128xbf16>, vector<8x128xf32> -> vector<8x128xf32>
    %c0_3 = arith.constant 0 : index
    %c0_4 = arith.constant 0 : index
    %3 = vector.load %arg3[%c0_3, %c0_4] : memref<1x128xf32, #tpu.memory_space<vmem>>, vector<1x128xf32>
    %4 = vector.broadcast %3 : vector<1x128xf32> to vector<8x128xf32>
    %5 = arith.addf %2, %4 : vector<8x128xf32>
    %c0_5 = arith.constant 0 : index
    %c0_6 = arith.constant 0 : index
    %6 = vector.load %arg4[%c0_5, %c0_6] : memref<8x128xf32, #tpu.memory_space<vmem>>, vector<8x128xf32>
    tpu.vector_store %arg4[%c0_5, %c0_6], %5 {strides = array<i32>} : memref<8x128xf32, #tpu.memory_space<vmem>>, vector<8x128xf32>,
    return
  }
  func.func @transform_0(%arg0: i32) -> (i32, i32) {
    %c0_i32 = arith.constant 0 : i32
    %c0_i32_0 = arith.constant 0 : i32
    %c0_i32_1 = arith.constant 0 : i32
    return %c0_i32, %c0_i32_0 : i32, i32
  }
  func.func @transform_1(%arg0: i32) -> (i32, i32) {
    %c0_i32 = arith.constant 0 : i32
    %c0_i32_0 = arith.constant 0 : i32
    return %c0_i32, %arg0 : i32, i32
  }
  func.func @transform_2(%arg0: i32) -> (i32, i32) {
    %c0_i32 = arith.constant 0 : i32
    %c0_i32_0 = arith.constant 0 : i32
    return %c0_i32, %arg0 : i32, i32
  }
  func.func @transform_3(%arg0: i32) -> (i32, i32) {
    %c0_i32 = arith.constant 0 : i32
    %c0_i32_0 = arith.constant 0 : i32
    return %c0_i32, %arg0 : i32, i32
  }
}

</mosaic_0001>

<llo_original>
// kernel: tailornet_ss2g_forward.2
$region0: #{tailornet_ss2g_forward.2}
  #allocation0 [shape = 'u32[]', space=smem, size = 0x4, offset = 0x4, fixed_abs, tag = 'smem constant byte address 0x4 - core index']
  #allocation1 [shape = 'u32[72,128]{1,0:T(1,128)}', space=vmem, size = 0x9000, scoped, tag = 'internal scratch']
  %s0 = inlined_call_operand.vmem [shape: f32[8,14], index: 0, kind: input, shape index: {}]
  %s1 = inlined_call_operand.vmem [shape: bf16[14,128], index: 1, kind: input, shape index: {}]
  %s2 = inlined_call_operand.vmem [shape: f32[1,128], index: 2, kind: input, shape index: {}]
  %s3 = inlined_call_operand.vmem [shape: bf16[128,128], index: 3, kind: input, shape index: {}]
  %s4 = inlined_call_operand.vmem [shape: f32[1,128], index: 4, kind: input, shape index: {}]
  %s5 = inlined_call_operand.vmem [shape: bf16[8,128], index: 5, kind: output, shape index: {}]
  %s6 = sld [smem:[#allocation0]]
  $region30: #{tailornet_ss2g_forward.2} parent=0
    _
  %s8 = ssub.s32 1, %s6
  %s9 = scalar_select 0, %s8, %s6
  // Predicated region
  $region2: #{tailornet_ss2g_forward.2} parent=0 // pred_check
    _
  $region3: #{tailornet_ss2g_forward.2} parent=0 // pred_check_branch
    %11 = sbr.rel (0) target = $region5
  $region4: #{tailornet_ss2g_forward.2} parent=0 // pred_region
    _
  $region5: #{tailornet_ss2g_forward.2} parent=0 // pred_fallthru
    _
  // Predicated region
  $region6: #{tailornet_ss2g_forward.2} parent=0 // pred_check
    _
  $region7: #{tailornet_ss2g_forward.2} parent=0 // pred_check_branch
    %13 = sbr.rel (0) target = $region9
  $region8: #{tailornet_ss2g_forward.2} parent=0 // pred_region
    _
  $region9: #{tailornet_ss2g_forward.2} parent=0 // pred_fallthru
    _
  // Predicated region
  $region10: #{tailornet_ss2g_forward.2} parent=0 // pred_check
    _
  $region11: #{tailornet_ss2g_forward.2} parent=0 // pred_check_branch
    %15 = sbr.rel (0) target = $region13
  $region12: #{tailornet_ss2g_forward.2} parent=0 // pred_region
    _
  $region13: #{tailornet_ss2g_forward.2} parent=0 // pred_fallthru
    _
  // Predicated region
  $region14: #{tailornet_ss2g_forward.2} parent=0 // pred_check
    _
  $region15: #{tailornet_ss2g_forward.2} parent=0 // pred_check_branch
    %17 = sbr.rel (0) target = $region17
  $region16: #{tailornet_ss2g_forward.2} parent=0 // pred_region
    _
  $region17: #{tailornet_ss2g_forward.2} parent=0 // pred_fallthru
    _
  // Predicated region
  $region18: #{tailornet_ss2g_forward.2} parent=0 // pred_check
    _
  $region19: #{tailornet_ss2g_forward.2} parent=0 // pred_check_branch
    %19 = sbr.rel (0) target = $region21
  $region20: #{tailornet_ss2g_forward.2} parent=0 // pred_region
    _
  $region21: #{tailornet_ss2g_forward.2} parent=0 // pred_fallthru
    _
  %v21 = vld [vmem:[%s0] sm:$0xff]
  %v22 = vpack.c.bf16 %v21, %v21
  %v23 = vld [vmem:[%s1] sm:$0xf]
  %v24 = vld [vmem:[%s1 + $0x4] sm:$0x7]
  %v25 = vld [vmem:[%s2] sm:$0x1]
  %v27 = vperm.slane %v25, 0
  %v31 = vunpack.c.l.b16 %v23
  %v32 = vunpack.c.l.b16 %v24
  %v33 = vpack.c.b16 %v32, %v31
  %vm34 = vcmask 113664
  %v36 = vsel %vm34, %v22, 0
  %vm38 = vcmask 1046528
  %v40 = vsel %vm38, %v33, 0
  %42 = vmatpush.bf16.msra.mxu0 0
  %43 = vmatpush.bf16.msra.mxu0 0
  %44 = vmatpush.bf16.msra.mxu0 0
  %45 = vmatpush.bf16.msra.mxu0 0
  %46 = vmatpush.bf16.msra.mxu0 0
  %47 = vmatpush.bf16.msra.mxu0 0
  %48 = vmatpush.bf16.msra.mxu0 0
  %49 = vmatpush.bf16.msra.mxu0 %v40
  %50 = vmatmul.bf16.gmra.mxu0 %v36
  %v51 = vpop.f32.mrf.mxu0
  %v52 = vadd.f32 %v27, %v51
  %v53 = vpop.f32.mrf.mxu0
  %54 = vdwg.mxu0
  %v55 = vmax.f32 %v52, 0.0
  %v56 = vpack.c.bf16 %v55, %v55
  %v57 = vld [vmem:[%s3] sm:$0xf]
  %v58 = vld [vmem:[%s3 + $0x4] sm:$0xf]
  %v59 = vld [vmem:[%s3 + $0x8] sm:$0xf]
  %v60 = vld [vmem:[%s3 + $0xc] sm:$0xf]
  %v61 = vld [vmem:[%s3 + $0x10] sm:$0xf]
  %v62 = vld [vmem:[%s3 + $0x14] sm:$0xf]
  %v63 = vld [vmem:[%s3 + $0x18] sm:$0xf]
  %v64 = vld [vmem:[%s3 + $0x1c] sm:$0xf]
  %v65 = vld [vmem:[%s3 + $0x20] sm:$0xf]
  %v66 = vld [vmem:[%s3 + $0x24] sm:$0xf]
  %v67 = vld [vmem:[%s3 + $0x28] sm:$0xf]
  %v68 = vld [vmem:[%s3 + $0x2c] sm:$0xf]
  %v69 = vld [vmem:[%s3 + $0x30] sm:$0xf]
  %v70 = vld [vmem:[%s3 + $0x34] sm:$0xf]
  %v71 = vld [vmem:[%s3 + $0x38] sm:$0xf]
  %v72 = vld [vmem:[%s3 + $0x3c] sm:$0xf]
  %v73 = vld [vmem:[%s4] sm:$0x1]
  %v75 = vperm.slane %v73, 0
  %v93 = vunpack.c.l.b16 %v57
  %v94 = vunpack.c.l.b16 %v58
  %v95 = vunpack.c.l.b16 %v59
  %v96 = vunpack.c.l.b16 %v60
  %v97 = vunpack.c.l.b16 %v61
  %v98 = vunpack.c.l.b16 %v62
  %v99 = vunpack.c.l.b16 %v63
  %v100 = vunpack.c.l.b16 %v64
  %v101 = vunpack.c.l.b16 %v65
  %v102 = vunpack.c.l.b16 %v66
  %v103 = vunpack.c.l.b16 %v67
  %v104 = vunpack.c.l.b16 %v68
  %v105 = vunpack.c.l.b16 %v69
  %v106 = vunpack.c.l.b16 %v70
  %v107 = vunpack.c.l.b16 %v71
  %v108 = vunpack.c.l.b16 %v72
  %v109 = vpack.c.b16 %v94, %v93
  %v110 = vpack.c.b16 %v96, %v95
  %v111 = vpack.c.b16 %v98, %v97
  %v112 = vpack.c.b16 %v100, %v99
  %v113 = vpack.c.b16 %v102, %v101
  %v114 = vpack.c.b16 %v104, %v103
  %v115 = vpack.c.b16 %v106, %v105
  %v116 = vpack.c.b16 %v108, %v107
  %125 = vmatpush.bf16.msra.mxu0 %v116
  %126 = vmatpush.bf16.msra.mxu0 %v115
  %127 = vmatpush.bf16.msra.mxu0 %v114
  %128 = vmatpush.bf16.msra.mxu0 %v113
  %129 = vmatpush.bf16.msra.mxu0 %v112
  %130 = vmatpush.bf16.msra.mxu0 %v111
  %131 = vmatpush.bf16.msra.mxu0 %v110
  %132 = vmatpush.bf16.msra.mxu0 %v109
  %133 = vmatmul.bf16.gmra.mxu0 %v56
  %v134 = vpop.f32.mrf.mxu0
  %v135 = vadd.f32 %v75, %v134
  %v136 = vpop.f32.mrf.mxu0
  %137 = vdwg.mxu0
  %v138 = vmax.f32 %v135, 0.0
  %v139 = vpack.c.bf16 %v138, %v138
  %140 = vst [vmem:[%s5] sm:$0xf] %v139
  // Predicated region
  $region22: #{tailornet_ss2g_forward.2} parent=0 // pred_check
    _
  $region23: #{tailornet_ss2g_forward.2} parent=0 // pred_check_branch
    %142 = sbr.rel (0) target = $region25
  $region24: #{tailornet_ss2g_forward.2} parent=0 // pred_region
    _
  $region25: #{tailornet_ss2g_forward.2} parent=0 // pred_fallthru
    _
  // Predicated region
  $region26: #{tailornet_ss2g_forward.2} parent=0 // pred_check
    _
  $region27: #{tailornet_ss2g_forward.2} parent=0 // pred_check_branch
    %144 = sbr.rel (0) target = $region29
  $region28: #{tailornet_ss2g_forward.2} parent=0 // pred_region
    _
  $region29: #{tailornet_ss2g_forward.2} parent=0 // pred_fallthru
    _

// kernel: tailornet_ss2g_forward.3
$region0: #{tailornet_ss2g_forward.3}
  #allocation0 [shape = 'u32[]', space=smem, size = 0x4, offset = 0x4, fixed_abs, tag = 'smem constant byte address 0x4 - core index']
  #allocation1 [shape = 'u32[72,128]{1,0:T(1,128)}', space=vmem, size = 0x9000, scoped, tag = 'internal scratch']
  %s0 = inlined_call_operand.vmem [shape: bf16[8,128], index: 0, kind: input, shape index: {}]
  %s1 = inlined_call_operand.vmem [shape: bf16[128,256], index: 1, kind: input, shape index: {}]
  %s2 = inlined_call_operand.vmem [shape: f32[1,256], index: 2, kind: input, shape index: {}]
  %s3 = inlined_call_operand.hbm [shape: f32[8,256], index: 3, kind: output, shape index: {}]
  %s4 = sld [smem:[#allocation0]]
  $region86: #{tailornet_ss2g_forward.3} parent=0
    _
  %s6 = ssub.s32 1, %s4
  %s7 = scalar_select 0, %s6, %s4
  $region1: #{tailornet_ss2g_forward.3} parent=0
    #allocation2 [shape = 'u8[65536]{0}', space=vmem, size = 0x10000, scoped, tag = 'input window, operand 1']
    #allocation3 [shape = 'u8[8192]{0}', space=vmem, size = 0x2000, scoped, tag = 'output window, operand 0']
    #allocation4 [shape = 's32[2]{0}', space=sflag, size = 0x8, scoped, tag = 'scoped memory for tailornet_ss2g_forward.3']
    %8 = vsyncpa [#allocation4], 0
    %s9 = scalar_lea.sflag [#allocation4], 1
    %10 = vsyncpa %s9, 0
    loop: start=0, step=1, limit=4
    $region2: #{tailornet_ss2g_forward.3} parent=1 // loop_pre_header
      _
    $region3: #{tailornet_ss2g_forward.3} parent=1 // loop_header
      %s12 = sphi 0, %s16
      %p13 = scmp.ge.s32.totalorder %s12, 4
      %s20 = sphi 0, %s20
      %s22 = sphi 0, %s20
      %s23 = sphi 0, %s22
      %s37 = sphi 0, %s23
      %s43 = sphi 0, %s45
      %s46 = sphi 0, %s43
      %s47 = sphi 0, %s46
      %s63 = sphi 0, %s47
      %s69 = sphi 0, %s71
      %s72 = sphi 0, %s69
      %s73 = sphi 0, %s72
      %s89 = sphi 0, %s73
      %s95 = sphi 0, %s97
      %s98 = sphi 0, %s95
      %s99 = sphi 0, %s98
      %s115 = sphi 0, %s99
    $region4: #{tailornet_ss2g_forward.3} parent=1 // loop_header_branch
      %15 = sbr.rel (%p13) target = $region8
    $region5: #{tailornet_ss2g_forward.3} parent=1 // loop_body
      %s17 = ssub.s32 %s12, 1
      %s18 = ssub.s32 %s12, 2
      %s19 = sadd.s32 %s12, 1
      %s21 = sadd.s32 %s20, 1
      %p24 = scmp.eq.s32.totalorder %s12, 1
      %p25 = scmp.ne.s32.totalorder %s20, %s22
      %p26 = scmp.eq.s32.totalorder %s12, 0
      %p27 = por %p25, %p26
      %p28 = scmp.ne.s32.totalorder %s20, %s22
      %p29 = scmp.eq.s32.totalorder %s17, 1
      %p30 = por %p28, %p29
      %p31 = scmp.ne.s32.totalorder %s22, %s23
      %p32 = scmp.eq.s32.totalorder %s17, 0
      %p33 = por %p31, %p32
      %p34 = scmp.ne.s32.totalorder %s22, %s23
      %p35 = scmp.eq.s32.totalorder %s18, 1
      %p36 = por %p34, %p35
      %p38 = scmp.ne.s32.totalorder %s23, %s37
      %p39 = scmp.eq.s32.totalorder %s18, 0
      %p40 = por %p38, %p39
      %s41 = ssub.s32 %s12, %s19
      %p42 = scmp.eq.s32.totalorder %s41, 0
      %s44 = sadd.s32 %s43, 1
      %s45 = scalar_select %p42, %s43, %s44
      %p48 = pneg %p42
      %p49 = scmp.eq.s32.totalorder %s12, 1
      %p50 = por %p48, %p49
      %p51 = scmp.ne.s32.totalorder %s43, %s46
      %p52 = scmp.eq.s32.totalorder %s12, 0
      %p53 = por %p51, %p52
      %p54 = scmp.ne.s32.totalorder %s43, %s46
      %p55 = scmp.eq.s32.totalorder %s17, 1
      %p56 = por %p54, %p55
      %p57 = scmp.ne.s32.totalorder %s46, %s47
      %p58 = scmp.eq.s32.totalorder %s17, 0
      %p59 = por %p57, %p58
      %p60 = scmp.ne.s32.totalorder %s46, %s47
      %p61 = scmp.eq.s32.totalorder %s18, 1
      %p62 = por %p60, %p61
      %p64 = scmp.ne.s32.totalorder %s47, %s63
      %p65 = scmp.eq.s32.totalorder %s18, 0
      %p66 = por %p64, %p65
      %s67 = ssub.s32 %s12, %s19
      %p68 = scmp.eq.s32.totalorder %s67, 0
      %s70 = sadd.s32 %s69, 1
      %s71 = scalar_select %p68, %s69, %s70
      %p74 = pneg %p68
      %p75 = scmp.eq.s32.totalorder %s12, 1
      %p76 = por %p74, %p75
      %p77 = scmp.ne.s32.totalorder %s69, %s72
      %p78 = scmp.eq.s32.totalorder %s12, 0
      %p79 = por %p77, %p78
      %p80 = scmp.ne.s32.totalorder %s69, %s72
      %p81 = scmp.eq.s32.totalorder %s17, 1
      %p82 = por %p80, %p81
      %p83 = scmp.ne.s32.totalorder %s72, %s73
      %p84 = scmp.eq.s32.totalorder %s17, 0
      %p85 = por %p83, %p84
      %p86 = scmp.ne.s32.totalorder %s72, %s73
      %p87 = scmp.eq.s32.totalorder %s18, 1
      %p88 = por %p86, %p87
      %p90 = scmp.ne.s32.totalorder %s73, %s89
      %p91 = scmp.eq.s32.totalorder %s18, 0
      %p92 = por %p90, %p91
      %s93 = ssub.s32 %s12, %s19
      %p94 = scmp.eq.s32.totalorder %s93, 0
      %s96 = sadd.s32 %s95, 1
      %s97 = scalar_select %p94, %s95, %s96
      %p100 = pneg %p94
      %p101 = scmp.eq.s32.totalorder %s12, 1
      %p102 = por %p100, %p101
      %p103 = scmp.ne.s32.totalorder %s95, %s98
      %p104 = scmp.eq.s32.totalorder %s12, 0
      %p105 = por %p103, %p104
      %p106 = scmp.ne.s32.totalorder %s95, %s98
      %p107 = scmp.eq.s32.totalorder %s17, 1
      %p108 = por %p106, %p107
      %p109 = scmp.ne.s32.totalorder %s98, %s99
      %p110 = scmp.eq.s32.totalorder %s17, 0
      %p111 = por %p109, %p110
      %p112 = scmp.ne.s32.totalorder %s98, %s99
      %p113 = scmp.eq.s32.totalorder %s18, 1
      %p114 = por %p112, %p113
      %p116 = scmp.ne.s32.totalorder %s99, %s115
      %p117 = scmp.eq.s32.totalorder %s18, 0
      %p118 = por %p116, %p117
      %p119 = scmp.le.s32.totalorder 1, %s12
      %p120 = scmp.lt.s32.totalorder %s12, 3
      %p121 = pnand %p119, %p120
      %p122 = pneg %p121
      // Predicated region
      $region9: #{tailornet_ss2g_forward.3} parent=5 // pred_check
        _
      $region10: #{tailornet_ss2g_forward.3} parent=5 // pred_check_branch
        %124 = sbr.rel (%p121) target = $region12
      $region11: #{tailornet_ss2g_forward.3} parent=5 // pred_region
        %s125 = ssub.s32 %s12, 1
        // Predicated region
        $region13: #{tailornet_ss2g_forward.3} parent=11 // pred_check
          %p126 = pneg %p33
        $region14: #{tailornet_ss2g_forward.3} parent=11 // pred_check_branch
          %128 = sbr.rel (%p126) target = $region16
        $region15: #{tailornet_ss2g_forward.3} parent=11 // pred_region
          _
        $region16: #{tailornet_ss2g_forward.3} parent=11 // pred_fallthru
          _
      $region12: #{tailornet_ss2g_forward.3} parent=5 // pred_fallthru
        _
      %p129 = scmp.lt.s32.totalorder %s12, 2
      // Predicated region
      $region17: #{tailornet_ss2g_forward.3} parent=5 // pred_check
        %p130 = pneg %p129
      $region18: #{tailornet_ss2g_forward.3} parent=5 // pred_check_branch
        %132 = sbr.rel (%p130) target = $region20
      $region19: #{tailornet_ss2g_forward.3} parent=5 // pred_region
        // Predicated region
        $region21: #{tailornet_ss2g_forward.3} parent=19 // pred_check
          %p133 = pneg %p53
        $region22: #{tailornet_ss2g_forward.3} parent=19 // pred_check_branch
          %135 = sbr.rel (%p133) target = $region24
        $region23: #{tailornet_ss2g_forward.3} parent=19 // pred_region
          %s136 = sand.u32 %s43, 1
          %s137 = sand.u32 %s43, 1
          %s138 = smul.addr %s137, 64
          %s139 = scalar_lea.vmem [#allocation2], %s138
          %s140 = smul.addr %s12, 4
          %s141 = scalar_lea.vmem %s1, %s140
          // Predicated region
          $region25: #{tailornet_ss2g_forward.3} parent=23 // pred_check
            _
          $region26: #{tailornet_ss2g_forward.3} parent=23 // pred_check_branch
            %143 = sbr.rel (0) target = $region28
          $region27: #{tailornet_ss2g_forward.3} parent=23 // pred_region
            // Predicated region
            $region29: #{tailornet_ss2g_forward.3} parent=27 // pred_check
              _
            $region30: #{tailornet_ss2g_forward.3} parent=27 // pred_check_branch
              %145 = sbr.rel target = $region32
            $region31: #{tailornet_ss2g_forward.3} parent=27 // pred_region
              // Predicated region
              $region44: #{tailornet_ss2g_forward.3} parent=31 // pred_check
                _
              $region45: #{tailornet_ss2g_forward.3} parent=31 // pred_check_branch
                %191 = sbr.rel (0) target = $region47
              $region46: #{tailornet_ss2g_forward.3} parent=31 // pred_region
                loop: start=0, step=1, limit=1
                $region48: #{tailornet_ss2g_forward.3} parent=46 // loop_pre_header
                  _
                $region49: #{tailornet_ss2g_forward.3} parent=46 // loop_header
                  %s193 = sphi 0, %s197
                  %p194 = scmp.ge.s32.totalorder %s193, 1
                  %s198 = sphi %s141, %s141
                  %s199 = sphi %s139, %s139
                $region50: #{tailornet_ss2g_forward.3} parent=46 // loop_header_branch
                  %196 = sbr.rel (%p194) target = $region54
                $region51: #{tailornet_ss2g_forward.3} parent=46 // loop_body
                  _
                $region52: #{tailornet_ss2g_forward.3} parent=46 // loop_footer
                  %s197 = sadd.s32 1, %s193
                $region53: #{tailornet_ss2g_forward.3} parent=46 // loop_footer_branch
                  %192 = sbr.rel target = $region49
                $region54: #{tailornet_ss2g_forward.3} parent=46 // loop_exit
                  _
                %s201 = ssub.s32 16, 1
                loop: start=0, step=1, limit=1
                $region55: #{tailornet_ss2g_forward.3} parent=46 // loop_pre_header
                  _
                $region56: #{tailornet_ss2g_forward.3} parent=46 // loop_header
                  %s203 = sphi 0, %s207
                  %p204 = scmp.ge.s32.totalorder %s203, 1
                  %s208 = sphi %s141, %s141
                  %s209 = sphi %s139, %s139
                $region57: #{tailornet_ss2g_forward.3} parent=46 // loop_header_branch
                  %206 = sbr.rel (%p204) target = $region61
                $region58: #{tailornet_ss2g_forward.3} parent=46 // loop_body
                  %v210 = vld [vmem:[%s208] sm:%s201]
                  %211 = vst [vmem:[%s209] sm:%s201] %v210
                  %v212 = vld [vmem:[%s208 + $0x8] sm:%s201]
                  %213 = vst [vmem:[%s209 + $0x4] sm:%s201] %v212
                  %v214 = vld [vmem:[%s208 + $0x10] sm:%s201]
                  %215 = vst [vmem:[%s209 + $0x8] sm:%s201] %v214
                  %v216 = vld [vmem:[%s208 + $0x18] sm:%s201]
                  %217 = vst [vmem:[%s209 + $0xc] sm:%s201] %v216
                  %v218 = vld [vmem:[%s208 + $0x20] sm:%s201]
                  %219 = vst [vmem:[%s209 + $0x10] sm:%s201] %v218
                  %v220 = vld [vmem:[%s208 + $0x28] sm:%s201]
                  %221 = vst [vmem:[%s209 + $0x14] sm:%s201] %v220
                  %v222 = vld [vmem:[%s208 + $0x30] sm:%s201]
                  %223 = vst [vmem:[%s209 + $0x18] sm:%s201] %v222
                  %v224 = vld [vmem:[%s208 + $0x38] sm:%s201]
                  %225 = vst [vmem:[%s209 + $0x1c] sm:%s201] %v224
                  %v226 = vld [vmem:[%s208 + $0x40] sm:%s201]
                  %227 = vst [vmem:[%s209 + $0x20] sm:%s201] %v226
                  %v228 = vld [vmem:[%s208 + $0x48] sm:%s201]
                  %229 = vst [vmem:[%s209 + $0x24] sm:%s201] %v228
                  %v230 = vld [vmem:[%s208 + $0x50] sm:%s201]
                  %231 = vst [vmem:[%s209 + $0x28] sm:%s201] %v230
                  %v232 = vld [vmem:[%s208 + $0x58] sm:%s201]
                  %233 = vst [vmem:[%s209 + $0x2c] sm:%s201] %v232
                  %v234 = vld [vmem:[%s208 + $0x60] sm:%s201]
                  %235 = vst [vmem:[%s209 + $0x30] sm:%s201] %v234
                  %v236 = vld [vmem:[%s208 + $0x68] sm:%s201]
                  %237 = vst [vmem:[%s209 + $0x34] sm:%s201] %v236
                  %v238 = vld [vmem:[%s208 + $0x70] sm:%s201]
                  %239 = vst [vmem:[%s209 + $0x38] sm:%s201] %v238
                  %v240 = vld [vmem:[%s208 + $0x78] sm:%s201]
                  %241 = vst [vmem:[%s209 + $0x3c] sm:%s201] %v240
                $region59: #{tailornet_ss2g_forward.3} parent=46 // loop_footer
                  %s207 = sadd.s32 1, %s203
                $region60: #{tailornet_ss2g_forward.3} parent=46 // loop_footer_branch
                  %202 = sbr.rel target = $region56
                $region61: #{tailornet_ss2g_forward.3} parent=46 // loop_exit
                  _
              $region47: #{tailornet_ss2g_forward.3} parent=31 // pred_fallthru
                _
            $region32: #{tailornet_ss2g_forward.3} parent=27 // pred_fallthru
              _
            // Predicated region
            $region33: #{tailornet_ss2g_forward.3} parent=27 // pred_check
              _
            $region34: #{tailornet_ss2g_forward.3} parent=27 // pred_check_branch
              %147 = sbr.rel (0) target = $region36
            $region35: #{tailornet_ss2g_forward.3} parent=27 // pred_region
              %s149 = ssub.s32 16, 1
              loop: start=0, step=1, limit=1
              $region37: #{tailornet_ss2g_forward.3} parent=35 // loop_pre_header
                _
              $region38: #{tailornet_ss2g_forward.3} parent=35 // loop_header
                %s151 = sphi 0, %s155
                %p152 = scmp.ge.s32.totalorder %s151, 1
                %s156 = sphi %s141, %s141
                %s157 = sphi %s139, %s139
              $region39: #{tailornet_ss2g_forward.3} parent=35 // loop_header_branch
                %154 = sbr.rel (%p152) target = $region43
              $region40: #{tailornet_ss2g_forward.3} parent=35 // loop_body
                %v158 = vld [vmem:[%s156] sm:%s149]
                %159 = vst [vmem:[%s157] sm:%s149] %v158
                %v160 = vld [vmem:[%s156 + $0x8] sm:%s149]
                %161 = vst [vmem:[%s157 + $0x4] sm:%s149] %v160
                %v162 = vld [vmem:[%s156 + $0x10] sm:%s149]
                %163 = vst [vmem:[%s157 + $0x8] sm:%s149] %v162
                %v164 = vld [vmem:[%s156 + $0x18] sm:%s149]
                %165 = vst [vmem:[%s157 + $0xc] sm:%s149] %v164
                %v166 = vld [vmem:[%s156 + $0x20] sm:%s149]
                %167 = vst [vmem:[%s157 + $0x10] sm:%s149] %v166
                %v168 = vld [vmem:[%s156 + $0x28] sm:%s149]
                %169 = vst [vmem:[%s157 + $0x14] sm:%s149] %v168
                %v170 = vld [vmem:[%s156 + $0x30] sm:%s149]
                %171 = vst [vmem:[%s157 + $0x18] sm:%s149] %v170
                %v172 = vld [vmem:[%s156 + $0x38] sm:%s149]
                %173 = vst [vmem:[%s157 + $0x1c] sm:%s149] %v172
                %v174 = vld [vmem:[%s156 + $0x40] sm:%s149]
                %175 = vst [vmem:[%s157 + $0x20] sm:%s149] %v174
                %v176 = vld [vmem:[%s156 + $0x48] sm:%s149]
                %177 = vst [vmem:[%s157 + $0x24] sm:%s149] %v176
                %v178 = vld [vmem:[%s156 + $0x50] sm:%s149]
                %179 = vst [vmem:[%s157 + $0x28] sm:%s149] %v178
                %v180 = vld [vmem:[%s156 + $0x58] sm:%s149]
                %181 = vst [vmem:[%s157 + $0x2c] sm:%s149] %v180
                %v182 = vld [vmem:[%s156 + $0x60] sm:%s149]
                %183 = vst [vmem:[%s157 + $0x30] sm:%s149] %v182
                %v184 = vld [vmem:[%s156 + $0x68] sm:%s149]
                %185 = vst [vmem:[%s157 + $0x34] sm:%s149] %v184
                %v186 = vld [vmem:[%s156 + $0x70] sm:%s149]
                %187 = vst [vmem:[%s157 + $0x38] sm:%s149] %v186
                %v188 = vld [vmem:[%s156 + $0x78] sm:%s149]
                %189 = vst [vmem:[%s157 + $0x3c] sm:%s149] %v188
              $region41: #{tailornet_ss2g_forward.3} parent=35 // loop_footer
                %s155 = sadd.s32 1, %s151
              $region42: #{tailornet_ss2g_forward.3} parent=35 // loop_footer_branch
                %150 = sbr.rel target = $region38
              $region43: #{tailornet_ss2g_forward.3} parent=35 // loop_exit
                _
            $region36: #{tailornet_ss2g_forward.3} parent=27 // pred_fallthru
              _
          $region28: #{tailornet_ss2g_forward.3} parent=23 // pred_fallthru
            _
          %242 = vnop
        $region24: #{tailornet_ss2g_forward.3} parent=19 // pred_fallthru
          _
        // Predicated region
        $region62: #{tailornet_ss2g_forward.3} parent=19 // pred_check
          %p243 = pneg %p79
        $region63: #{tailornet_ss2g_forward.3} parent=19 // pred_check_branch
          %245 = sbr.rel (%p243) target = $region65
        $region64: #{tailornet_ss2g_forward.3} parent=19 // pred_region
          %p246 = scmp.lt.s32.totalorder %s12, 1
          %s247 = scalar_select %p246, %s12, 1
          %s248 = scalar_lea.vmem %s2, %s247
        $region65: #{tailornet_ss2g_forward.3} parent=19 // pred_fallthru
          _
      $region20: #{tailornet_ss2g_forward.3} parent=5 // pred_fallthru
        _
      %p249 = scmp.le.s32.totalorder 1, %s12
      %p250 = scmp.lt.s32.totalorder %s12, 3
      %p251 = pnand %p249, %p250
      %p252 = pneg %p251
      // Predicated region
      $region66: #{tailornet_ss2g_forward.3} parent=5 // pred_check
        _
      $region67: #{tailornet_ss2g_forward.3} parent=5 // pred_check_branch
        %254 = sbr.rel (%p251) target = $region69
      $region68: #{tailornet_ss2g_forward.3} parent=5 // pred_region
        %s255 = ssub.s32 %s12, 1
        %s256 = sand.u32 %s46, 1
        %s257 = sand.u32 %s46, 1
        %s258 = smul.addr %s257, 64
        %s259 = scalar_lea.vmem [#allocation2], %s258
        // Predicated region
        $region70: #{tailornet_ss2g_forward.3} parent=68 // pred_check
          %p260 = pneg %p59
        $region71: #{tailornet_ss2g_forward.3} parent=68 // pred_check_branch
          %262 = sbr.rel (%p260) target = $region73
        $region72: #{tailornet_ss2g_forward.3} parent=68 // pred_region
          _
        $region73: #{tailornet_ss2g_forward.3} parent=68 // pred_fallthru
          _
        %p263 = pneg %p33
        %p264 = pneg %p30
        %s265 = sand.u32 %s46, 1
        %s266 = sand.u32 %s46, 1
        %s267 = smul.addr %s266, 64
        %s268 = scalar_lea.vmem [#allocation2], %s267
        %p269 = pneg %p59
        %p270 = pneg %p56
        %p271 = scmp.lt.s32.totalorder %s17, 1
        %s272 = scalar_select %p271, %s17, 1
        %s273 = scalar_lea.vmem %s2, %s272
        %p274 = pneg %p85
        %p275 = pneg %p82
        %p276 = pneg %p111
        %p277 = pneg %p108
        %s278 = sand.u32 %s98, 1
        %s279 = scalar_lea.sflag [#allocation4], %s278
        %s280 = sand.u32 %s98, 1
        %s281 = smul.addr %s280, 8
        %s282 = scalar_lea.vmem [#allocation3], %s281
        %p283 = scmp.lt.s32.totalorder %s17, 1
        %s284 = scalar_select %p283, %s17, 1
        %s285 = scalar_lea.vmem %s2, %s284
        %v286 = vld [vmem:[%s0] sm:$0xf]
        %v287 = vld [vmem:[%s259] sm:$0xf]
        %v288 = vld [vmem:[%s259 + $0x4] sm:$0xf]
        %v289 = vld [vmem:[%s259 + $0x8] sm:$0xf]
        %v290 = vld [vmem:[%s259 + $0xc] sm:$0xf]
        %v291 = vld [vmem:[%s259 + $0x10] sm:$0xf]
        %v292 = vld [vmem:[%s259 + $0x14] sm:$0xf]
        %v293 = vld [vmem:[%s259 + $0x18] sm:$0xf]
        %v294 = vld [vmem:[%s259 + $0x1c] sm:$0xf]
        %v295 = vld [vmem:[%s259 + $0x20] sm:$0xf]
        %v296 = vld [vmem:[%s259 + $0x24] sm:$0xf]
        %v297 = vld [vmem:[%s259 + $0x28] sm:$0xf]
        %v298 = vld [vmem:[%s259 + $0x2c] sm:$0xf]
        %v299 = vld [vmem:[%s259 + $0x30] sm:$0xf]
        %v300 = vld [vmem:[%s259 + $0x34] sm:$0xf]
        %v301 = vld [vmem:[%s259 + $0x38] sm:$0xf]
        %v302 = vld [vmem:[%s259 + $0x3c] sm:$0xf]
        %v303 = vld [vmem:[%s285] sm:$0x1]
        %v305 = vperm.slane %v303, 0
        %v323 = vunpack.c.l.b16 %v287
        %v324 = vunpack.c.l.b16 %v288
        %v325 = vunpack.c.l.b16 %v289
        %v326 = vunpack.c.l.b16 %v290
        %v327 = vunpack.c.l.b16 %v291
        %v328 = vunpack.c.l.b16 %v292
        %v329 = vunpack.c.l.b16 %v293
        %v330 = vunpack.c.l.b16 %v294
        %v331 = vunpack.c.l.b16 %v295
        %v332 = vunpack.c.l.b16 %v296
        %v333 = vunpack.c.l.b16 %v297
        %v334 = vunpack.c.l.b16 %v298
        %v335 = vunpack.c.l.b16 %v299
        %v336 = vunpack.c.l.b16 %v300
        %v337 = vunpack.c.l.b16 %v301
        %v338 = vunpack.c.l.b16 %v302
        %v339 = vpack.c.b16 %v324, %v323
        %v340 = vpack.c.b16 %v326, %v325
        %v341 = vpack.c.b16 %v328, %v327
        %v342 = vpack.c.b16 %v330, %v329
        %v343 = vpack.c.b16 %v332, %v331
        %v344 = vpack.c.b16 %v334, %v333
        %v345 = vpack.c.b16 %v336, %v335
        %v346 = vpack.c.b16 %v338, %v337
        %355 = vmatpush.bf16.msra.mxu0 %v346
        %356 = vmatpush.bf16.msra.mxu0 %v345
        %357 = vmatpush.bf16.msra.mxu0 %v344
        %358 = vmatpush.bf16.msra.mxu0 %v343
        %359 = vmatpush.bf16.msra.mxu0 %v342
        %360 = vmatpush.bf16.msra.mxu0 %v341
        %361 = vmatpush.bf16.msra.mxu0 %v340
        %362 = vmatpush.bf16.msra.mxu0 %v339
        %363 = vmatmul.bf16.gmra.mxu0 %v286
        %v364 = vpop.f32.mrf.mxu0
        %v365 = vadd.f32 %v305, %v364
        %v366 = vpop.f32.mrf.mxu0
        %367 = vdwg.mxu0
        %368 = vst [vmem:[%s282] sm:$0xff] %v365
        %s369 = sand.u32 %s98, 1
        %s370 = scalar_lea.sflag [#allocation4], %s369
        %s371 = sand.u32 %s98, 1
        %s372 = smul.addr %s371, 8
        %s373 = scalar_lea.vmem [#allocation3], %s372
        // Predicated region
        $region74: #{tailornet_ss2g_forward.3} parent=68 // pred_check
          %p374 = pneg %p108
        $region75: #{tailornet_ss2g_forward.3} parent=68 // pred_check_branch
          %376 = sbr.rel (%p374) target = $region77
        $region76: #{tailornet_ss2g_forward.3} parent=68 // pred_region
          %378 = vsyncadd %s370, 0
          %s379 = smul.addr %s17, 8
          %s380 = scalar_lea.hbm %s3, %s379
          %s382 = sshll.u32 %s373, 4
          %s383 = int_to_ptr.vmem [resolvable:$true] %s382
          %s384 = sshll.u32 %s380, 4
          %s385 = int_to_ptr.hbm [resolvable:$true] %s384
          %387 = dma.vmem_to_hbm [thread:$0]  %s383, 128, %s385, %s370
        $region77: #{tailornet_ss2g_forward.3} parent=68 // pred_fallthru
          _
      $region69: #{tailornet_ss2g_forward.3} parent=5 // pred_fallthru
        _
      %p388 = scmp.le.s32.totalorder 2, %s12
      // Predicated region
      $region78: #{tailornet_ss2g_forward.3} parent=5 // pred_check
        %p389 = pneg %p388
      $region79: #{tailornet_ss2g_forward.3} parent=5 // pred_check_branch
        %391 = sbr.rel (%p389) target = $region81
      $region80: #{tailornet_ss2g_forward.3} parent=5 // pred_region
        %s392 = ssub.s32 %s12, 2
        // Predicated region
        $region82: #{tailornet_ss2g_forward.3} parent=80 // pred_check
          %p393 = pneg %p114
        $region83: #{tailornet_ss2g_forward.3} parent=80 // pred_check_branch
          %395 = sbr.rel (%p393) target = $region85
        $region84: #{tailornet_ss2g_forward.3} parent=80 // pred_region
          %s396 = sand.u32 %s99, 1
          %s397 = scalar_lea.sflag [#allocation4], %s396
          %s398 = sand.u32 %s99, 1
          %s399 = smul.addr %s398, 8
          %s400 = scalar_lea.vmem [#allocation3], %s399
          %402 = dma.done %s397, 128
        $region85: #{tailornet_ss2g_forward.3} parent=80 // pred_fallthru
          _
      $region81: #{tailornet_ss2g_forward.3} parent=5 // pred_fallthru
        _
    $region6: #{tailornet_ss2g_forward.3} parent=1 // loop_footer
      %s16 = sadd.s32 1, %s12
    $region7: #{tailornet_ss2g_forward.3} parent=1 // loop_footer_branch
      %11 = sbr.rel target = $region3
    $region8: #{tailornet_ss2g_forward.3} parent=1 // loop_exit
      _
    %403 = vsyncpa [#allocation4], 1
    %s404 = scalar_lea.sflag [#allocation4], 1
    %405 = vsyncpa %s404, 1

</llo_original>
